<compile_context>
chip_gen: v7x
topology: tpu7x:2x2x1
jax: 0.10.0
libtpu: 0.0.40
codegen_flags: <defaults>
</compile_context>

<pallas_src>
import functools
import math

import jax
import jax.numpy as jnp
from jax.experimental import pallas as pl
from jax.experimental.pallas import tpu as pltpu

DURATION = 0.1
FORCE_CLIP = 1.0            # synthetic neg_force_clipped(x) = clip(x, -FORCE_CLIP, FORCE_CLIP)
LANE_MAX = 2048             # max lane width per tile (multiple of 128)
MIN_STEPS = 4               # min row tiles per batch for pipelining / v7x 2-TC sharding
TINY_BYTES = 256 * 1024     # below this per batch: single block, pipelining not worth it


def _round_up(a, b):
    return (a + b - 1) // b * b


def _round_down(a, b):
    return a // b * b


def _vmem_budget():
    """(per-array block byte budget, vmem_limit_bytes) derived from the chip's VMEM."""
    vmem_cap = 64 * 1024 * 1024
    try:
        info = pltpu.get_tpu_info()
        vmem_cap = int(getattr(info, "vmem_capacity_bytes", vmem_cap))
    except Exception:
        pass  # fall back to conservative (v7x-safe) budget
    if vmem_cap <= 64 * 1024 * 1024:               # v7x-class: 64 MiB per TensorCore
        return 4 * 1024 * 1024, 48 * 1024 * 1024
    return 8 * 1024 * 1024, 64 * 1024 * 1024       # v5e / v6e: 128 MiB VMEM


def _correction_kernel(fs_ref, ls_ref, ss_ref, x_ref, score_ref, o_ref, *, force_clip):
    # fs/ls/ss: (B,) f32 schedule coefficients in SMEM (scalar prefetch);
    # x/score/o: (1, tm, lane) VMEM tiles.
    b = pl.program_id(0)
    fs = fs_ref[b]
    ls = ls_ref[b]
    ss = ss_ref[b]

    x = x_ref[...].astype(jnp.float32)
    s = score_ref[...].astype(jnp.float32)

    # TODO(synk): replace with the real data_handler.distribution.neg_force_clipped.
    neg_force = jnp.clip(x, -force_clip, force_clip)

    out = fs * neg_force - ls * x + ss * s
    o_ref[...] = out.astype(o_ref.dtype)


def _schedules(t, duration):
    """Per-batch schedule coefficients, computed once in plain JAX on (B,) t."""
    t = t.astype(jnp.float32)
    force_sched = jnp.where(t < duration, -t / duration + 1.0, 0.0)
    linear_sched = jnp.where(t > 1.0 - duration, (t - 1.0 + duration) / duration, 0.0)
    left = max(0.001, min(duration, 1.0 - duration))
    right = min(0.999, max(duration, 1.0 - duration))
    score_sched = jnp.where(t < left, t / left,
                            jnp.where(t > right, -(t - 1.0) / (1.0 - right), 1.0))
    return force_sched, linear_sched, score_sched


def _choose_layout(N, itemsize, block_bytes):
    """Pick (lane, rows, tm, pad_to). pad_to == N means no wrapper-side padding."""
    # Prefer a lane width that divides N exactly (free reshape, no pad / no slice).
    lane = 0
    for k in range(min(LANE_MAX, _round_down(N, 128)) // 128, 0, -1):
        cand = 128 * k
        if N % cand == 0:
            lane = cand
            break
    if lane:
        pad_to = N
    else:
        # Fallback: N has no 128-multiple divisor; pad < 128 elements per batch.
        lane = 128
        pad_to = _round_up(N, lane)
    rows = pad_to // lane

    sub = {4: 8, 2: 16, 1: 32}.get(itemsize, 8)
    if rows <= sub or N * itemsize < TINY_BYTES:
        tm = rows  # full extent: single block per batch (tiny problem)
    else:
        budget_rows = max(sub, _round_down(block_bytes // (lane * itemsize), sub))
        target_rows = max(sub, _round_down(rows // MIN_STEPS, sub))  # >= MIN_STEPS tiles
        tm = min(budget_rows, target_rows)
    return lane, rows, tm, pad_to


def correction_forward(x, t, score, *, duration=DURATION, force_clip=FORCE_CLIP,
                       block_bytes=None, vmem_limit_bytes=None):
    """x, score: (B, ...); t: (B,). Returns array with score's dtype / x's shape."""
    if duration is None or duration == 0:
        return score

    orig_shape = x.shape
    out_dtype = score.dtype
    B = x.shape[0]
    N = math.prod(x.shape[1:])

    default_block, default_vmem = _vmem_budget()
    if block_bytes is None:
        block_bytes = default_block
    if vmem_limit_bytes is None:
        vmem_limit_bytes = default_vmem

    itemsize = max(jnp.dtype(x.dtype).itemsize, jnp.dtype(out_dtype).itemsize)
    lane, rows, tm, pad_to = _choose_layout(N, itemsize, block_bytes)

    # --- per-batch schedule coefficients (hoisted out of the kernel, SMEM-bound) ---
    fs, ls, ss = _schedules(t, float(duration))

    # --- lane-dense layout (B, rows, lane); reshape is free when pad_to == N ---
    x2 = x.reshape(B, N)
    s2 = score.reshape(B, N)
    if pad_to != N:
        pad = ((0, 0), (0, pad_to - N))
        x2 = jnp.pad(x2, pad)
        s2 = jnp.pad(s2, pad)
    x3 = x2.reshape(B, rows, lane)
    s3 = s2.reshape(B, rows, lane)

    row_tiles = pl.cdiv(rows, tm)
    grid = (B, row_tiles)

    kernel = functools.partial(_correction_kernel, force_clip=float(force_clip))
    data_spec = pl.BlockSpec((1, tm, lane), lambda b, i, *_: (b, i, 0))

    n_elems = B * rows * lane
    cost = pl.CostEstimate(
        flops=6 * n_elems,
        transcendentals=0,
        bytes_accessed=(n_elems * (jnp.dtype(x.dtype).itemsize
                                   + jnp.dtype(score.dtype).itemsize
                                   + jnp.dtype(out_dtype).itemsize)
                        + 3 * B * 4))

    out3 = pl.pallas_call(
        kernel,
        out_shape=jax.ShapeDtypeStruct((B, rows, lane), out_dtype),
        grid_spec=pltpu.PrefetchScalarGridSpec(
            num_scalar_prefetch=3,          # fs, ls, ss -> SMEM
            grid=grid,
            in_specs=[data_spec,            # x
                      data_spec],           # score
            out_specs=pl.BlockSpec((1, tm, lane), lambda b, i, *_: (b, i, 0)),
        ),
        compiler_params=pltpu.CompilerParams(
            dimension_semantics=("parallel", "parallel"),
            vmem_limit_bytes=vmem_limit_bytes),
        cost_estimate=cost,
    )(fs, ls, ss, x3, s3)

    out2 = out3.reshape(B, rows * lane)
    if pad_to != N:
        out2 = out2[:, :N]
    return out2.reshape(orig_shape)


def _reference_forward(x, t, score, *, duration=DURATION, force_clip=FORCE_CLIP):
    """Pure-JAX reference mirroring the PyTorch module semantics."""
    if duration is None or duration == 0:
        return score
    bshape = (x.shape[0],) + (1,) * (x.ndim - 1)
    fs, ls, ss = _schedules(t, float(duration))
    xf = x.astype(jnp.float32)
    sf = score.astype(jnp.float32)
    neg_force = jnp.clip(xf, -force_clip, force_clip)
    out = (fs.reshape(bshape) * neg_force
           + ls.reshape(bshape) * (-xf)
           + ss.reshape(bshape) * sf)
    return out.astype(score.dtype)


if __name__ == "__main__":
    key = jax.random.PRNGKey(0)
    kx, kt, ks = jax.random.split(key, 3)

    # Case 1: module-like small shape (B, C, H, W); N divisible by 128 -> no-pad path.
    B, C, H, W = 2, 4, 16, 16
    x = jax.random.normal(kx, (B, C, H, W), dtype=jnp.float32)
    t = jax.random.uniform(kt, (B,), dtype=jnp.float32)
    score = jax.random.normal(ks, (B, C, H, W), dtype=jnp.float32)
    out = jax.block_until_ready(correction_forward(x, t, score))
    ref = _reference_forward(x, t, score)
    assert out.shape == (B, C, H, W)
    assert jnp.allclose(out, ref, atol=1e-5, rtol=1e-5), "mismatch vs reference (case 1)"

    # Case 2: feature size not divisible by 128 (exercises the small-pad fallback).
    x2 = jax.random.normal(kx, (2, 3, 10, 10), dtype=jnp.float32)
    t2 = jax.random.uniform(kt, (2,), dtype=jnp.float32)
    s2 = jax.random.normal(ks, (2, 3, 10, 10), dtype=jnp.float32)
    o2 = jax.block_until_ready(correction_forward(x2, t2, s2))
    assert jnp.allclose(o2, _reference_forward(x2, t2, s2), atol=1e-5, rtol=1e-5), \
        "mismatch vs reference (case 2)"

    # Case 3: larger feature dim -> multi-tile pipelined path (>= MIN_STEPS row tiles/batch).
    x3 = jax.random.normal(kx, (2, 8, 128, 128), dtype=jnp.float32)
    t3 = jax.random.uniform(kt, (2,), dtype=jnp.float32)
    s3 = jax.random.normal(ks, (2, 8, 128, 128), dtype=jnp.float32)
    o3 = jax.block_until_ready(correction_forward(x3, t3, s3))
    assert jnp.allclose(o3, _reference_forward(x3, t3, s3), atol=1e-5, rtol=1e-5), \
        "mismatch vs reference (case 3)"

    # Case 4: bf16 inputs/outputs (sub-32-bit packing path).
    x4 = jax.random.normal(kx, (2, 4, 32, 128), dtype=jnp.bfloat16)
    t4 = jax.random.uniform(kt, (2,), dtype=jnp.float32)
    s4 = jax.random.normal(ks, (2, 4, 32, 128), dtype=jnp.bfloat16)
    o4 = jax.block_until_ready(correction_forward(x4, t4, s4))
    r4 = _reference_forward(x4, t4, s4)
    assert o4.dtype == jnp.bfloat16
    assert jnp.allclose(o4.astype(jnp.float32), r4.astype(jnp.float32),
                        atol=2e-2, rtol=2e-2), "mismatch vs reference (case 4)"

    print("KERNEL_OK")
</pallas_src>

<mosaic_0001>
module attributes {stable_mosaic.version = 11 : i64} {
  func.func @_correction_kernel(%arg0: i32, %arg1: i32, %arg2: memref<2xf32, #tpu.memory_space<smem>>, %arg3: memref<2xf32, #tpu.memory_space<smem>>, %arg4: memref<2xf32, #tpu.memory_space<smem>>, %arg5: memref<1x1x1024xf32, #tpu.memory_space<vmem>>, %arg6: memref<1x1x1024xf32, #tpu.memory_space<vmem>>, %arg7: memref<1x1x1024xf32, #tpu.memory_space<vmem>>) attributes {dimension_semantics = [#tpu.dimension_semantics<parallel>, #tpu.dimension_semantics<parallel>], iteration_bounds = array<i64: 2, 1>, scalar_prefetch = 3 : i64, scratch_operands = 0 : i64, tpu.core_type = #tpu.core_type<tc>, window_params = [{transform_indices = @transform_0, window_bounds = array<i64: 1, 1, 1024>}, {transform_indices = @transform_1, window_bounds = array<i64: 1, 1, 1024>}, {transform_indices = @transform_2, window_bounds = array<i64: 1, 1, 1024>}]} {
    %0 = arith.index_cast %arg0 : i32 to index
    %1 = memref.load %arg2[%0] : memref<2xf32, #tpu.memory_space<smem>>
    %2 = arith.index_cast %arg0 : i32 to index
    %3 = memref.load %arg3[%2] : memref<2xf32, #tpu.memory_space<smem>>
    %4 = arith.index_cast %arg0 : i32 to index
    %5 = memref.load %arg4[%4] : memref<2xf32, #tpu.memory_space<smem>>
    %c0 = arith.constant 0 : index
    %c0_0 = arith.constant 0 : index
    %c0_1 = arith.constant 0 : index
    %6 = vector.load %arg5[%c0, %c0_0, %c0_1] : memref<1x1x1024xf32, #tpu.memory_space<vmem>>, vector<1x1x1024xf32>
    %c0_2 = arith.constant 0 : index
    %c0_3 = arith.constant 0 : index
    %c0_4 = arith.constant 0 : index
    %7 = vector.load %arg6[%c0_2, %c0_3, %c0_4] : memref<1x1x1024xf32, #tpu.memory_space<vmem>>, vector<1x1x1024xf32>
    %cst = arith.constant -1.000000e+00 : f32
    %cst_5 = arith.constant 1.000000e+00 : f32
    %8 = vector.broadcast %cst : f32 to vector<1x1x1024xf32>
    %9 = arith.maximumf %8, %6 : vector<1x1x1024xf32>
    %10 = vector.broadcast %cst_5 : f32 to vector<1x1x1024xf32>
    %11 = arith.minimumf %10, %9 : vector<1x1x1024xf32>
    %12 = vector.broadcast %1 : f32 to vector<1x1x1024xf32>
    %13 = arith.mulf %12, %11 : vector<1x1x1024xf32>
    %14 = vector.broadcast %3 : f32 to vector<1x1x1024xf32>
    %15 = arith.mulf %14, %6 : vector<1x1x1024xf32>
    %16 = arith.subf %13, %15 : vector<1x1x1024xf32>
    %17 = vector.broadcast %5 : f32 to vector<1x1x1024xf32>
    %18 = arith.mulf %17, %7 : vector<1x1x1024xf32>
    %19 = arith.addf %16, %18 : vector<1x1x1024xf32>
    %c0_6 = arith.constant 0 : index
    %c0_7 = arith.constant 0 : index
    %c0_8 = arith.constant 0 : index
    %20 = vector.load %arg7[%c0_6, %c0_7, %c0_8] : memref<1x1x1024xf32, #tpu.memory_space<vmem>>, vector<1x1x1024xf32>
    tpu.vector_store %arg7[%c0_6, %c0_7, %c0_8], %19 {strides = array<i32>} : memref<1x1x1024xf32, #tpu.memory_space<vmem>>, vector<1x1x1024xf32>,
    return
  }
  func.func @transform_0(%arg0: i32, %arg1: i32, %arg2: memref<2xf32, #tpu.memory_space<smem>>, %arg3: memref<2xf32, #tpu.memory_space<smem>>, %arg4: memref<2xf32, #tpu.memory_space<smem>>) -> (i32, i32, i32) {
    %c0_i32 = arith.constant 0 : i32
    %c0_i32_0 = arith.constant 0 : i32
    return %arg0, %arg1, %c0_i32 : i32, i32, i32
  }
  func.func @transform_1(%arg0: i32, %arg1: i32, %arg2: memref<2xf32, #tpu.memory_space<smem>>, %arg3: memref<2xf32, #tpu.memory_space<smem>>, %arg4: memref<2xf32, #tpu.memory_space<smem>>) -> (i32, i32, i32) {
    %c0_i32 = arith.constant 0 : i32
    %c0_i32_0 = arith.constant 0 : i32
    return %arg0, %arg1, %c0_i32 : i32, i32, i32
  }
  func.func @transform_2(%arg0: i32, %arg1: i32, %arg2: memref<2xf32, #tpu.memory_space<smem>>, %arg3: memref<2xf32, #tpu.memory_space<smem>>, %arg4: memref<2xf32, #tpu.memory_space<smem>>) -> (i32, i32, i32) {
    %c0_i32 = arith.constant 0 : i32
    %c0_i32_0 = arith.constant 0 : i32
    return %arg0, %arg1, %c0_i32 : i32, i32, i32
  }
}

</mosaic_0001>

<llo_original>
// kernel: tpu_custom_call.1
$region0: #{tpu_custom_call.1}
  #allocation0 [shape = 'u32[]', space=smem, size = 0x4, offset = 0x4, fixed_abs, tag = 'smem constant byte address 0x4 - core index']
  #allocation1 [shape = 'u32[144,128]{1,0:T(1,128)}', space=vmem, size = 0x12000, scoped, tag = 'internal scratch']
  #allocation2 [shape = 's32[1]{0}', space=sflag, size = 0x4, scoped, tag = 'scoped memory for tpu_custom_call.1']
  #allocation3 [shape = 'u8[512]{0}', space=smem, size = 0x200, scoped, tag = 'prefetched SMEM operand 0']
  #allocation4 [shape = 'u8[512]{0}', space=smem, size = 0x200, scoped, tag = 'prefetched SMEM operand 1']
  #allocation5 [shape = 'u8[512]{0}', space=smem, size = 0x200, scoped, tag = 'prefetched SMEM operand 2']
  %s0 = inlined_call_operand.hbm [shape: f32[2], index: 0, kind: input, shape index: {}]
  %s1 = inlined_call_operand.vmem [shape: f32[2], index: 1, kind: input, shape index: {}]
  %s2 = inlined_call_operand.vmem [shape: f32[2], index: 2, kind: input, shape index: {}]
  %s3 = inlined_call_operand.hbm [shape: f32[2,1,1024], index: 3, kind: input, shape index: {}]
  %s4 = inlined_call_operand.hbm [shape: f32[2,1,1024], index: 4, kind: input, shape index: {}]
  %s5 = inlined_call_operand.hbm [shape: f32[2,1,1024], index: 5, kind: output, shape index: {}]
  %s6 = sld [smem:[#allocation0]]
  $region49: #{tpu_custom_call.1} parent=0
    _
  %s8 = ssub.s32 1, %s6
  %s9 = scalar_select 0, %s8, %s6
  %11 = dma.hbm_to_smem %s0, 16, [#allocation3], [#allocation2]
  %s12 = sshll.u32 %s1, 4
  %s13 = int_to_ptr.vmem [resolvable:$true] %s12
  %15 = dma.vmem_to_smem %s13, 16, [#allocation4], [#allocation2]
  %s16 = sshll.u32 %s2, 4
  %s17 = int_to_ptr.vmem [resolvable:$true] %s16
  %19 = dma.vmem_to_smem %s17, 16, [#allocation5], [#allocation2]
  %20 = dma.done [#allocation2], 48
  %21 = sfence
  $region1: #{tpu_custom_call.1} parent=0
    #allocation6 [shape = 'u8[8192]{0}', space=vmem, size = 0x2000, scoped, tag = 'input window, operand 3']
    #allocation7 [shape = 's32[2]{0}', space=sflag, size = 0x8, scoped, tag = 'scoped memory for tpu_custom_call.1']
    #allocation8 [shape = 's32[2]{0}', space=sflag, size = 0x8, scoped, tag = 'scoped memory for tpu_custom_call.1']
    #allocation9 [shape = 'u8[8192]{0}', space=vmem, size = 0x2000, scoped, tag = 'input window, operand 4']
    #allocation10 [shape = 's32[2]{0}', space=sflag, size = 0x8, scoped, tag = 'scoped memory for tpu_custom_call.1']
    #allocation11 [shape = 'u8[8192]{0}', space=vmem, size = 0x2000, scoped, tag = 'output window, operand 0']
    %22 = vsyncpa [#allocation7], 0
    %s23 = scalar_lea.sflag [#allocation7], 1
    %24 = vsyncpa %s23, 0
    %25 = vsyncpa [#allocation10], 0
    %s26 = scalar_lea.sflag [#allocation10], 1
    %27 = vsyncpa %s26, 0
    %28 = vsyncpa [#allocation8], 0
    %s29 = scalar_lea.sflag [#allocation8], 1
    %30 = vsyncpa %s29, 0
    loop: start=0, step=1, limit=4
    $region2: #{tpu_custom_call.1} parent=1 // loop_pre_header
      _
    $region3: #{tpu_custom_call.1} parent=1 // loop_header
      %s32 = sphi 0, %s36
      %p33 = scmp.ge.s32.totalorder %s32, 4
      %s39 = sphi 0, %s51
      %s40 = sphi 0, %s47
      %s41 = sphi 0, %s39
      %s42 = sphi 0, %s40
      %s43 = sphi 0, %s41
      %s44 = sphi 0, %s42
      %s56 = sphi 0, %s58
      %s59 = sphi 0, %s56
      %s60 = sphi 0, %s59
      %s76 = sphi 0, %s60
      %s84 = sphi 0, %s86
      %s87 = sphi 0, %s84
      %s88 = sphi 0, %s87
      %s104 = sphi 0, %s88
      %s112 = sphi 0, %s114
      %s115 = sphi 0, %s112
      %s116 = sphi 0, %s115
      %s132 = sphi 0, %s116
    $region4: #{tpu_custom_call.1} parent=1 // loop_header_branch
      %35 = sbr.rel (%p33) target = $region8
    $region5: #{tpu_custom_call.1} parent=1 // loop_body
      %s37 = ssub.s32 %s32, 1
      %s38 = ssub.s32 %s32, 2
      %s45 = sadd.s32 1, %s40
      %p46 = scmp.ge.s32.totalorder %s45, 1
      %s47 = scalar_select %p46, 0, %s45
      %s48 = sadd.s32 1, %s39
      %s49 = scalar_select %p46, %s48, %s39
      %p50 = scmp.ge.s32.totalorder %s49, 2
      %s51 = scalar_select %p50, 0, %s49
      %s52 = ssub.s32 %s39, %s51
      %s53 = ssub.s32 %s40, %s47
      %s54 = sor.u32 %s52, %s53
      %p55 = scmp.eq.s32.totalorder %s54, 0
      %s57 = sadd.s32 %s56, 1
      %s58 = scalar_select %p55, %s56, %s57
      %p61 = pneg %p55
      %p62 = scmp.eq.s32.totalorder %s32, 1
      %p63 = por %p61, %p62
      %p64 = scmp.ne.s32.totalorder %s56, %s59
      %p65 = scmp.eq.s32.totalorder %s32, 0
      %p66 = por %p64, %p65
      %p67 = scmp.ne.s32.totalorder %s56, %s59
      %p68 = scmp.eq.s32.totalorder %s37, 1
      %p69 = por %p67, %p68
      %p70 = scmp.ne.s32.totalorder %s59, %s60
      %p71 = scmp.eq.s32.totalorder %s37, 0
      %p72 = por %p70, %p71
      %p73 = scmp.ne.s32.totalorder %s59, %s60
      %p74 = scmp.eq.s32.totalorder %s38, 1
      %p75 = por %p73, %p74
      %p77 = scmp.ne.s32.totalorder %s60, %s76
      %p78 = scmp.eq.s32.totalorder %s38, 0
      %p79 = por %p77, %p78
      %s80 = ssub.s32 %s39, %s51
      %s81 = ssub.s32 %s40, %s47
      %s82 = sor.u32 %s80, %s81
      %p83 = scmp.eq.s32.totalorder %s82, 0
      %s85 = sadd.s32 %s84, 1
      %s86 = scalar_select %p83, %s84, %s85
      %p89 = pneg %p83
      %p90 = scmp.eq.s32.totalorder %s32, 1
      %p91 = por %p89, %p90
      %p92 = scmp.ne.s32.totalorder %s84, %s87
      %p93 = scmp.eq.s32.totalorder %s32, 0
      %p94 = por %p92, %p93
      %p95 = scmp.ne.s32.totalorder %s84, %s87
      %p96 = scmp.eq.s32.totalorder %s37, 1
      %p97 = por %p95, %p96
      %p98 = scmp.ne.s32.totalorder %s87, %s88
      %p99 = scmp.eq.s32.totalorder %s37, 0
      %p100 = por %p98, %p99
      %p101 = scmp.ne.s32.totalorder %s87, %s88
      %p102 = scmp.eq.s32.totalorder %s38, 1
      %p103 = por %p101, %p102
      %p105 = scmp.ne.s32.totalorder %s88, %s104
      %p106 = scmp.eq.s32.totalorder %s38, 0
      %p107 = por %p105, %p106
      %s108 = ssub.s32 %s39, %s51
      %s109 = ssub.s32 %s40, %s47
      %s110 = sor.u32 %s108, %s109
      %p111 = scmp.eq.s32.totalorder %s110, 0
      %s113 = sadd.s32 %s112, 1
      %s114 = scalar_select %p111, %s112, %s113
      %p117 = pneg %p111
      %p118 = scmp.eq.s32.totalorder %s32, 1
      %p119 = por %p117, %p118
      %p120 = scmp.ne.s32.totalorder %s112, %s115
      %p121 = scmp.eq.s32.totalorder %s32, 0
      %p122 = por %p120, %p121
      %p123 = scmp.ne.s32.totalorder %s112, %s115
      %p124 = scmp.eq.s32.totalorder %s37, 1
      %p125 = por %p123, %p124
      %p126 = scmp.ne.s32.totalorder %s115, %s116
      %p127 = scmp.eq.s32.totalorder %s37, 0
      %p128 = por %p126, %p127
      %p129 = scmp.ne.s32.totalorder %s115, %s116
      %p130 = scmp.eq.s32.totalorder %s38, 1
      %p131 = por %p129, %p130
      %p133 = scmp.ne.s32.totalorder %s116, %s132
      %p134 = scmp.eq.s32.totalorder %s38, 0
      %p135 = por %p133, %p134
      %p136 = scmp.le.s32.totalorder 1, %s32
      %p137 = scmp.lt.s32.totalorder %s32, 3
      %p138 = pnand %p136, %p137
      %p139 = pneg %p138
      // Predicated region
      $region9: #{tpu_custom_call.1} parent=5 // pred_check
        _
      $region10: #{tpu_custom_call.1} parent=5 // pred_check_branch
        %141 = sbr.rel (%p138) target = $region12
      $region11: #{tpu_custom_call.1} parent=5 // pred_region
        %s142 = ssub.s32 %s32, 1
      $region12: #{tpu_custom_call.1} parent=5 // pred_fallthru
        _
      %p143 = scmp.lt.s32.totalorder %s32, 2
      // Predicated region
      $region13: #{tpu_custom_call.1} parent=5 // pred_check
        %p144 = pneg %p143
      $region14: #{tpu_custom_call.1} parent=5 // pred_check_branch
        %146 = sbr.rel (%p144) target = $region16
      $region15: #{tpu_custom_call.1} parent=5 // pred_region
        // Predicated region
        $region17: #{tpu_custom_call.1} parent=15 // pred_check
          %p147 = pneg %p66
        $region18: #{tpu_custom_call.1} parent=15 // pred_check_branch
          %149 = sbr.rel (%p147) target = $region20
        $region19: #{tpu_custom_call.1} parent=15 // pred_region
          %s150 = sand.u32 %s56, 1
          %s151 = scalar_lea.sflag [#allocation7], %s150
          %s152 = sand.u32 %s56, 1
          %s153 = smul.addr %s152, 8
          %s154 = scalar_lea.vmem [#allocation6], %s153
          %s156 = ssub.s32 128, 128
          %157 = vsyncadd %s151, %s156
          %s158 = smul.addr %s40, 8
          %s159 = smul.addr %s39, 8
          %s160 = sadd.s32 %s158, %s159
          %s161 = smul.addr %s160, 16
          %s162 = scalar_lea.hbm %s3, %s161
          %s164 = sshll.u32 %s154, 4
          %s165 = int_to_ptr.vmem [resolvable:$true] %s164
          %167 = dma.hbm_to_vmem [thread:$0]  %s162, 128, %s165, %s151
        $region20: #{tpu_custom_call.1} parent=15 // pred_fallthru
          _
        // Predicated region
        $region21: #{tpu_custom_call.1} parent=15 // pred_check
          %p168 = pneg %p94
        $region22: #{tpu_custom_call.1} parent=15 // pred_check_branch
          %170 = sbr.rel (%p168) target = $region24
        $region23: #{tpu_custom_call.1} parent=15 // pred_region
          %s171 = sand.u32 %s84, 1
          %s172 = scalar_lea.sflag [#allocation10], %s171
          %s173 = sand.u32 %s84, 1
          %s174 = smul.addr %s173, 8
          %s175 = scalar_lea.vmem [#allocation9], %s174
          %s177 = ssub.s32 128, 128
          %178 = vsyncadd %s172, %s177
          %s179 = smul.addr %s40, 8
          %s180 = smul.addr %s39, 8
          %s181 = sadd.s32 %s179, %s180
          %s182 = smul.addr %s181, 16
          %s183 = scalar_lea.hbm %s4, %s182
          %s185 = sshll.u32 %s175, 4
          %s186 = int_to_ptr.vmem [resolvable:$true] %s185
          %188 = dma.hbm_to_vmem [thread:$0]  %s183, 128, %s186, %s172
        $region24: #{tpu_custom_call.1} parent=15 // pred_fallthru
          _
      $region16: #{tpu_custom_call.1} parent=5 // pred_fallthru
        _
      %p189 = scmp.le.s32.totalorder 1, %s32
      %p190 = scmp.lt.s32.totalorder %s32, 3
      %p191 = pnand %p189, %p190
      %p192 = pneg %p191
      // Predicated region
      $region25: #{tpu_custom_call.1} parent=5 // pred_check
        _
      $region26: #{tpu_custom_call.1} parent=5 // pred_check_branch
        %194 = sbr.rel (%p191) target = $region28
      $region27: #{tpu_custom_call.1} parent=5 // pred_region
        %s195 = ssub.s32 %s32, 1
        %s196 = sand.u32 %s59, 1
        %s197 = scalar_lea.sflag [#allocation7], %s196
        %s198 = sand.u32 %s59, 1
        %s199 = smul.addr %s198, 8
        %s200 = scalar_lea.vmem [#allocation6], %s199
        // Predicated region
        $region29: #{tpu_custom_call.1} parent=27 // pred_check
          %p201 = pneg %p72
        $region30: #{tpu_custom_call.1} parent=27 // pred_check_branch
          %203 = sbr.rel (%p201) target = $region32
        $region31: #{tpu_custom_call.1} parent=27 // pred_region
          %204 = dma.done %s197, 128
        $region32: #{tpu_custom_call.1} parent=27 // pred_fallthru
          _
        %s205 = sand.u32 %s87, 1
        %s206 = scalar_lea.sflag [#allocation10], %s205
        %s207 = sand.u32 %s87, 1
        %s208 = smul.addr %s207, 8
        %s209 = scalar_lea.vmem [#allocation9], %s208
        // Predicated region
        $region33: #{tpu_custom_call.1} parent=27 // pred_check
          %p210 = pneg %p100
        $region34: #{tpu_custom_call.1} parent=27 // pred_check_branch
          %212 = sbr.rel (%p210) target = $region36
        $region35: #{tpu_custom_call.1} parent=27 // pred_region
          %213 = dma.done %s206, 128
        $region36: #{tpu_custom_call.1} parent=27 // pred_fallthru
          _
        %s214 = sand.u32 %s59, 1
        %s215 = scalar_lea.sflag [#allocation7], %s214
        %s216 = sand.u32 %s59, 1
        %s217 = smul.addr %s216, 8
        %s218 = scalar_lea.vmem [#allocation6], %s217
        %p219 = pneg %p72
        %p220 = pneg %p69
        %s221 = sand.u32 %s87, 1
        %s222 = scalar_lea.sflag [#allocation10], %s221
        %s223 = sand.u32 %s87, 1
        %s224 = smul.addr %s223, 8
        %s225 = scalar_lea.vmem [#allocation9], %s224
        %p226 = pneg %p100
        %p227 = pneg %p97
        %p228 = pneg %p128
        %p229 = pneg %p125
        %s230 = sand.u32 %s115, 1
        %s231 = scalar_lea.sflag [#allocation8], %s230
        %s232 = sand.u32 %s115, 1
        %s233 = smul.addr %s232, 8
        %s234 = scalar_lea.vmem [#allocation11], %s233
        %s235 = sld [smem:[#allocation3 + %s41]]
        %s236 = sld [smem:[#allocation4 + %s41]]
        %s237 = sld [smem:[#allocation5 + %s41]]
        %v238 = vld [vmem:[%s200] sm:$0xff]
        %v239 = vld [vmem:[%s209] sm:$0xff]
        %v240 = vmax.f32 %v238, -1.0
        %v241 = vmin.f32 %v240, 1.0
        %v242 = vstv %s235
        %v243 = vmul.f32 %v242, %v241
        %v244 = vstv %s236
        %v245 = vmul.f32 %v244, %v238
        %v246 = vsub.f32 %v243, %v245
        %v247 = vstv %s237
        %v248 = vmul.f32 %v247, %v239
        %v249 = vadd.f32 %v246, %v248
        %250 = vst [vmem:[%s234] sm:$0xff] %v249
        %s251 = sand.u32 %s115, 1
        %s252 = scalar_lea.sflag [#allocation8], %s251
        %s253 = sand.u32 %s115, 1
        %s254 = smul.addr %s253, 8
        %s255 = scalar_lea.vmem [#allocation11], %s254
        // Predicated region
        $region37: #{tpu_custom_call.1} parent=27 // pred_check
          %p256 = pneg %p125
        $region38: #{tpu_custom_call.1} parent=27 // pred_check_branch
          %258 = sbr.rel (%p256) target = $region40
        $region39: #{tpu_custom_call.1} parent=27 // pred_region
          %s260 = ssub.s32 128, 128
          %261 = vsyncadd %s252, %s260
          %s262 = smul.addr %s42, 8
          %s263 = smul.addr %s41, 8
          %s264 = sadd.s32 %s262, %s263
          %s265 = smul.addr %s264, 16
          %s266 = scalar_lea.hbm %s5, %s265
          %s268 = sshll.u32 %s255, 4
          %s269 = int_to_ptr.vmem [resolvable:$true] %s268
          %271 = dma.vmem_to_hbm [thread:$0]  %s269, 128, %s266, %s252
        $region40: #{tpu_custom_call.1} parent=27 // pred_fallthru
          _
      $region28: #{tpu_custom_call.1} parent=5 // pred_fallthru
        _
      %p272 = scmp.le.s32.totalorder 2, %s32
      // Predicated region
      $region41: #{tpu_custom_call.1} parent=5 // pred_check
        %p273 = pneg %p272
      $region42: #{tpu_custom_call.1} parent=5 // pred_check_branch
        %275 = sbr.rel (%p273) target = $region44
      $region43: #{tpu_custom_call.1} parent=5 // pred_region
        %s276 = ssub.s32 %s32, 2
        // Predicated region
        $region45: #{tpu_custom_call.1} parent=43 // pred_check
          %p277 = pneg %p131
        $region46: #{tpu_custom_call.1} parent=43 // pred_check_branch
          %279 = sbr.rel (%p277) target = $region48
        $region47: #{tpu_custom_call.1} parent=43 // pred_region
          %s280 = sand.u32 %s116, 1
          %s281 = scalar_lea.sflag [#allocation8], %s280
          %s282 = sand.u32 %s116, 1
          %s283 = smul.addr %s282, 8
          %s284 = scalar_lea.vmem [#allocation11], %s283
          %285 = dma.done %s281, 128
        $region48: #{tpu_custom_call.1} parent=43 // pred_fallthru
          _
      $region44: #{tpu_custom_call.1} parent=5 // pred_fallthru
        _
    $region6: #{tpu_custom_call.1} parent=1 // loop_footer
      %s36 = sadd.s32 1, %s32
    $region7: #{tpu_custom_call.1} parent=1 // loop_footer_branch
      %31 = sbr.rel target = $region3
    $region8: #{tpu_custom_call.1} parent=1 // loop_exit
      _
    %286 = vsyncpa [#allocation7], 1
    %s287 = scalar_lea.sflag [#allocation7], 1
    %288 = vsyncpa %s287, 1
    %289 = vsyncpa [#allocation10], 1
    %s290 = scalar_lea.sflag [#allocation10], 1
    %291 = vsyncpa %s290, 1
    %292 = vsyncpa [#allocation8], 1
    %s293 = scalar_lea.sflag [#allocation8], 1
    %294 = vsyncpa %s293, 1

</llo_original>
